<compile_context>
chip_gen: v6e
topology: v6e:2x2x1
jax: 0.10.0
libtpu: 0.0.40
codegen_flags: <defaults>
</compile_context>

<pallas_src>
import math

import jax
import jax.numpy as jnp
from jax.experimental import pallas as pl
from jax.experimental.pallas import tpu as pltpu


def _dma_copy_kernel(x_hbm_ref, o_hbm_ref, sem):
    # Whole-array HBM -> HBM copy on the DMA engine (no VMEM, no TC work).
    cp = pltpu.make_async_copy(x_hbm_ref, o_hbm_ref, sem)
    cp.start()
    cp.wait()


def flatten(x: jax.Array) -> jax.Array:
    """Equivalent of torch `x.view(x.size(0), -1)` for any rank >= 1 input."""
    n = x.shape[0]
    f = math.prod(x.shape[1:]) if x.ndim > 1 else 1

    # Row-major collapse of trailing dims (metadata-only; == torch .view on a
    # contiguous NCHW tensor).
    x2d = x.reshape(n, f)

    # Cheapest possible materialization: one HBM->HBM DMA, no VMEM staging,
    # no grid, no tiling constraints.
    return pl.pallas_call(
        _dma_copy_kernel,
        out_shape=jax.ShapeDtypeStruct((n, f), x.dtype),
        in_specs=[pl.BlockSpec(memory_space=pl.ANY)],
        out_specs=pl.BlockSpec(memory_space=pl.ANY),
        scratch_shapes=[pltpu.SemaphoreType.DMA],
    )(x2d)


if __name__ == "__main__":
    key = jax.random.PRNGKey(0)

    # Small NCHW input consistent with a conv-backbone feature map.
    x = jax.random.normal(key, (2, 4, 16, 16), dtype=jnp.float32)
    out = jax.block_until_ready(flatten(x))
    ref = x.reshape(x.shape[0], -1)
    assert out.shape == (2, 4 * 16 * 16)
    assert out.dtype == x.dtype
    assert bool(jnp.all(out == ref))

    # F not a multiple of 128 (F = 3*7*7 = 147): same uniform DMA path.
    x2 = jax.random.normal(jax.random.PRNGKey(0), (2, 3, 7, 7), dtype=jnp.float32)
    out2 = jax.block_until_ready(flatten(x2))
    assert out2.shape == (2, 147)
    assert bool(jnp.all(out2 == x2.reshape(2, -1)))

    # bf16 input: dtype is preserved and the copy is bit-exact.
    x3 = jax.random.normal(jax.random.PRNGKey(0), (2, 4, 8, 8), dtype=jnp.bfloat16)
    out3 = jax.block_until_ready(flatten(x3))
    assert out3.dtype == jnp.bfloat16
    assert bool(jnp.all(out3 == x3.reshape(2, -1)))

    print("KERNEL_OK")
</pallas_src>

<mosaic_0001>
module attributes {stable_mosaic.version = 11 : i64} {
  func.func @_dma_copy_kernel(%arg0: memref<2x1024xf32, #tpu.memory_space<any>>, %arg1: memref<2x1024xf32, #tpu.memory_space<any>>, %arg2: memref<!tpu.dma_semaphore, #tpu.memory_space<semaphore_mem>>) attributes {dimension_semantics = [], scalar_prefetch = 0 : i64, scratch_operands = 1 : i64, tpu.core_type = #tpu.core_type<tc>} {
    tpu.enqueue_dma source(%arg0 : memref<2x1024xf32, #tpu.memory_space<any>>) target(%arg1 : memref<2x1024xf32, #tpu.memory_space<any>>) target_semaphore(%arg2 : memref<!tpu.dma_semaphore, #tpu.memory_space<semaphore_mem>>)
    tpu.wait_dma2 semaphore(%arg2 : memref<!tpu.dma_semaphore, #tpu.memory_space<semaphore_mem>>) src(%arg0 : memref<2x1024xf32, #tpu.memory_space<any>>) dst(%arg1 : memref<2x1024xf32, #tpu.memory_space<any>>)
    return
  }
}

</mosaic_0001>

<llo_original>
// kernel: tpu_custom_call.1
$region0: #{tpu_custom_call.1}
  #allocation0 [shape = 'u32[]', space=smem, size = 0x4, offset = 0x4, fixed_abs, tag = 'smem constant byte address 0x4 - core index']
  #allocation1 [shape = 'u32[144,128]{1,0:T(1,128)}', space=vmem, size = 0x12000, scoped, tag = 'internal scratch']
  #allocation2 [shape = 's32[1]{0}', space=sflag, size = 0x4, scoped, tag = 'scratch operand']
  #allocation3 [shape = 's32[]', space=sflag, size = 0x4, offset = 0, fixed_abs, tag = 'sflag constant byte address 0x0 - dummy sync flag']
  #allocation4 [shape = 'u32[0]{0}', space=smem, size = 0, offset = 0, fixed_abs, tag = 'smem constant byte address 0x0 - null']
  %s0 = inlined_call_operand.hbm [shape: f32[2,1024], index: 0, kind: input, shape index: {}]
  %s1 = inlined_call_operand.hbm [shape: f32[2,1024], index: 1, kind: output, shape index: {}]
  %s2 = sld [smem:[#allocation0]]
  $region2: #{tpu_custom_call.1} parent=0
    _
  %s4 = ssub.s32 1, %s2
  %s5 = scalar_select 0, %s4, %s2
  %s7 = sshll.u32 1, 14
  %s8 = sxor.u32 4294967295, %s7
  %12 = dma.general %s0, 256, %s1, [#allocation2], 131072, [#allocation4], 0, 0
  %s13 = smul.u32 2, 1
  %s14 = smul.u32 %s13, 8
  %s15 = sshll.u32 %s14, 4
  %16 = dma.done [#allocation2], %s15
  %17 = vsyncmov [#allocation2]
  %s18 = vpop.sfrf %17
  %p19 = scmp.eq.s32.totalorder %s18, 0
  %p20 = pneg %p19
  %22 = shalt.err (%p20)

</llo_original>
